<compile_context>
chip_gen: v5e
topology: v5e:2x2
jax: 0.10.0
libtpu: 0.0.40
codegen_flags: <defaults>
</compile_context>

<pallas_src>
import math

import jax
import jax.numpy as jnp
from jax.experimental import pallas as pl
from jax.experimental.pallas import tpu as pltpu

VAR = 1.0 / 128.0 ** 2
LOGVAR = math.log(VAR)

_MAX_TILE_ROWS = 256  # 256 x 2048 f32 = 2 MiB per input stream per buffer


def _round_up(a, b):
    return ((a + b - 1) // b) * b


def _num_cores_per_chip():
    """TensorCores per JAX device: 2 on v7x/v4/v5p megacore chips, else 1."""
    try:
        kind = jax.devices()[0].device_kind.lower()
    except Exception:
        return 1
    if "lite" in kind:
        return 1
    return 2 if any(tag in kind for tag in ("v7", "7x", "v4", "v5p")) else 1


def _choose_tiling(n, n_cores):
    """Pick (tile_rows, lane_width, n_cores) for n flattened elements.

    Prefers tilings with zero padding (the flat reshape is then a free bitcast
    and the wrapper pad copies disappear); falls back to a padded lane-dense
    tiling.  tile_rows is always a multiple of 16 so the same block is legal
    for f32 and bf16 inputs.
    """
    if n <= 16 * 128 * n_cores:          # tiny problem: one core, one small tile
        n_cores = 1

    # Exact (pad == 0) search, widest lanes first.  Only accept if the tile
    # stays large (>= 128 rows, or the whole per-core extent) so the ~0.35 us
    # per-grid-step overhead stays amortized.
    for lane_w in (2048, 1024, 512, 256, 128):
        if n % lane_w:
            continue
        rows = n // lane_w
        if rows % (16 * n_cores):
            continue
        per_core = rows // n_cores
        t = min(_MAX_TILE_ROWS, per_core)
        t -= t % 16
        t_min = min(128, t)
        while t >= t_min:
            if per_core % t == 0:
                return t, lane_w, n_cores
            t -= 16

    # Fallback: padded lane-dense tiling.
    lane_w = 128
    for lw in (2048, 1024, 512, 256):
        if n >= 16 * lw:
            lane_w = lw
            break
    rows = pl.cdiv(n, lane_w)
    tile_r = _MAX_TILE_ROWS if rows >= _MAX_TILE_ROWS else _round_up(rows, 16)
    return tile_r, lane_w, n_cores


def gauss_nll(x, y):
    """x: [B, N, C], y: [B, N]. Returns scalar mean Gaussian NLL (float32)."""
    mu = x[:, :, 1]
    logvar = x[:, :, -1]

    n = mu.size                                   # static python int
    tile_r, lane_w, n_cores = _choose_tiling(n, _num_cores_per_chip())

    rows = pl.cdiv(n, lane_w)
    tiles = pl.cdiv(rows, tile_r)
    tiles_per_core = pl.cdiv(tiles, n_cores)
    total_rows = n_cores * tiles_per_core * tile_r
    total = total_rows * lane_w
    pad = total - n                               # static; 0 on the exact path

    def prep(a):
        flat = a.reshape(-1)
        if pad:
            # Zero pad: each pad element contributes exactly VAR to the sum
            # (exp(-0) == 1); that constant is subtracted after the kernel.
            flat = jnp.pad(flat, (0, pad))
        return flat.reshape(total_rows, lane_w)   # free bitcast when pad == 0

    mu2, lv2, y2 = prep(mu), prep(logvar), prep(y)

    def kernel(mu_ref, lv_ref, y_ref, out_ref, acc_ref):
        i = pl.program_id(1)

        @pl.when(i == 0)
        def _():
            acc_ref[...] = jnp.zeros_like(acc_ref)

        mu_t = mu_ref[...].astype(jnp.float32)    # casts happen in vregs
        lv_t = lv_ref[...].astype(jnp.float32)
        y_t = y_ref[...].astype(jnp.float32)
        diff = y_t - mu_t
        # Only the data-dependent part lives in the hot loop; the affine
        # constants and the zero-pad correction are applied once in the
        # wrapper on the reduced scalar.
        acc_ref[...] += lv_t + (VAR + diff * diff) * jnp.exp(-lv_t)

        @pl.when(i == pl.num_programs(1) - 1)
        def _():
            # single cross-lane reduce per core in the epilogue
            out_ref[...] = jnp.sum(acc_ref[...]).reshape(1, 1, 1)

    tile_spec = pl.BlockSpec((tile_r, lane_w),
                             lambda c, i: (c * tiles_per_core + i, 0))

    cost = pl.CostEstimate(
        flops=8 * total,
        transcendentals=total,
        bytes_accessed=2 * total * x.dtype.itemsize
                       + total * y.dtype.itemsize + 4 * n_cores)

    partials = pl.pallas_call(
        kernel,
        out_shape=jax.ShapeDtypeStruct((n_cores, 1, 1), jnp.float32),
        grid_spec=pltpu.PrefetchScalarGridSpec(
            num_scalar_prefetch=0,
            grid=(n_cores, tiles_per_core),
            in_specs=[tile_spec, tile_spec, tile_spec],
            out_specs=pl.BlockSpec((1, 1, 1), lambda c, i: (c, 0, 0)),
            scratch_shapes=[pltpu.VMEM((tile_r, lane_w), jnp.float32)],
        ),
        compiler_params=pltpu.CompilerParams(
            # "parallel" shards the leading axis across TensorCores on
            # multi-TC chips.  TODO(synk): on v7x confirm with a profile that
            # both cores pull HBM; if not, switch to pltpu.CORE_PARALLEL.
            dimension_semantics=("parallel", "arbitrary"),
            vmem_limit_bytes=32 * 1024 * 1024),
        cost_estimate=cost,
    )(mu2, lv2, y2)

    # total = 0.5 * (sum_t - pad*VAR - n*(LOGVAR+1)) / n; all constants static.
    return (0.5 / n) * (jnp.sum(partials) - (pad * VAR + n * (LOGVAR + 1.0)))


def gauss_nll_ref(x, y):
    mu = x[:, :, 1]
    logvar = x[:, :, -1]
    res = 0.5 * (logvar - LOGVAR + (VAR + (y - mu) ** 2) / jnp.exp(logvar) - 1.0)
    return jnp.mean(res)


if __name__ == "__main__":
    key = jax.random.PRNGKey(0)
    kx, ky = jax.random.split(key)
    B, N, C = 2, 16, 4
    x = jax.random.normal(kx, (B, N, C), dtype=jnp.float32)
    y = jax.random.normal(ky, (B, N), dtype=jnp.float32)

    fn = jax.jit(gauss_nll)
    out = jax.block_until_ready(fn(x, y))
    ref = jax.block_until_ready(gauss_nll_ref(x, y))

    assert jnp.allclose(out, ref, rtol=1e-5, atol=1e-5), (out, ref)
    print("KERNEL_OK")
</pallas_src>

<mosaic_0001>
module attributes {stable_mosaic.version = 11 : i64} {
  func.func @kernel(%arg0: i32, %arg1: i32, %arg2: memref<16x128xf32, #tpu.memory_space<vmem>>, %arg3: memref<16x128xf32, #tpu.memory_space<vmem>>, %arg4: memref<16x128xf32, #tpu.memory_space<vmem>>, %arg5: memref<1x1x1xf32, #tpu.memory_space<vmem>>, %arg6: memref<16x128xf32, #tpu.memory_space<vmem>>) attributes {dimension_semantics = [#tpu.dimension_semantics<parallel>, #tpu.dimension_semantics<arbitrary>], iteration_bounds = array<i64: 1, 1>, scalar_prefetch = 0 : i64, scratch_operands = 1 : i64, tpu.core_type = #tpu.core_type<tc>, window_params = [{transform_indices = @transform_0, window_bounds = array<i64: 16, 128>}, {transform_indices = @transform_1, window_bounds = array<i64: 16, 128>}, {transform_indices = @transform_2, window_bounds = array<i64: 16, 128>}, {transform_indices = @transform_3, window_bounds = array<i64: 1, 1, 1>}]} {
    %c0_i32 = arith.constant 0 : i32
    %0 = arith.cmpi eq, %arg1, %c0_i32 : i32
    %1 = arith.extui %0 : i1 to i32
    %c0_i32_0 = arith.constant 0 : i32
    %2 = arith.cmpi ne, %1, %c0_i32_0 : i32
    scf.if %2 {
      %cst_13 = arith.constant 0.000000e+00 : f32
      %21 = vector.broadcast %cst_13 : f32 to vector<16x128xf32>
      %c0_14 = arith.constant 0 : index
      %c0_15 = arith.constant 0 : index
      %22 = vector.load %arg6[%c0_14, %c0_15] : memref<16x128xf32, #tpu.memory_space<vmem>>, vector<16x128xf32>
      tpu.vector_store %arg6[%c0_14, %c0_15], %21 {strides = array<i32>} : memref<16x128xf32, #tpu.memory_space<vmem>>, vector<16x128xf32>,
    } else {
    }
    %c0 = arith.constant 0 : index
    %c0_1 = arith.constant 0 : index
    %3 = vector.load %arg2[%c0, %c0_1] : memref<16x128xf32, #tpu.memory_space<vmem>>, vector<16x128xf32>
    %c0_2 = arith.constant 0 : index
    %c0_3 = arith.constant 0 : index
    %4 = vector.load %arg3[%c0_2, %c0_3] : memref<16x128xf32, #tpu.memory_space<vmem>>, vector<16x128xf32>
    %c0_4 = arith.constant 0 : index
    %c0_5 = arith.constant 0 : index
    %5 = vector.load %arg4[%c0_4, %c0_5] : memref<16x128xf32, #tpu.memory_space<vmem>>, vector<16x128xf32>
    %6 = arith.subf %5, %3 : vector<16x128xf32>
    %c0_6 = arith.constant 0 : index
    %c0_7 = arith.constant 0 : index
    %7 = vector.load %arg6[%c0_6, %c0_7] : memref<16x128xf32, #tpu.memory_space<vmem>>, vector<16x128xf32>
    %8 = arith.mulf %6, %6 : vector<16x128xf32>
    %cst = arith.constant 6.10351563E-5 : f32
    %9 = vector.broadcast %cst : f32 to vector<16x128xf32>
    %10 = arith.addf %9, %8 : vector<16x128xf32>
    %cst_8 = arith.constant 0.000000e+00 : f32
    %11 = vector.broadcast %cst_8 : f32 to vector<16x128xf32>
    %12 = arith.subf %11, %4 : vector<16x128xf32>
    %13 = math.exp %12 : vector<16x128xf32>
    %14 = arith.mulf %10, %13 : vector<16x128xf32>
    %15 = arith.addf %4, %14 : vector<16x128xf32>
    %16 = arith.addf %7, %15 : vector<16x128xf32>
    %c0_9 = arith.constant 0 : index
    %c0_10 = arith.constant 0 : index
    %17 = vector.load %arg6[%c0_9, %c0_10] : memref<16x128xf32, #tpu.memory_space<vmem>>, vector<16x128xf32>
    tpu.vector_store %arg6[%c0_9, %c0_10], %16 {strides = array<i32>} : memref<16x128xf32, #tpu.memory_space<vmem>>, vector<16x128xf32>,
    %c0_i32_11 = arith.constant 0 : i32
    %18 = arith.cmpi eq, %arg1, %c0_i32_11 : i32
    %19 = arith.extui %18 : i1 to i32
    %c0_i32_12 = arith.constant 0 : i32
    %20 = arith.cmpi ne, %19, %c0_i32_12 : i32
    scf.if %20 {
      %c0_13 = arith.constant 0 : index
      %c0_14 = arith.constant 0 : index
      %21 = vector.load %arg6[%c0_13, %c0_14] : memref<16x128xf32, #tpu.memory_space<vmem>>, vector<16x128xf32>
      %22 = vector.shape_cast %21 : vector<16x128xf32> to vector<1x16x128xf32>
      %cst_15 = arith.constant dense<0.000000e+00> : vector<1xf32>
      %23 = vector.multi_reduction <add>, %22, %cst_15 [1, 2] : vector<1x16x128xf32> to vector<1xf32>
      %24 = vector.shape_cast %23 : vector<1xf32> to vector<1x1x1xf32>
      %25 = vector.extract %24[0, 0, 0] : f32 from vector<1x1x1xf32>
      %26 = vector.broadcast %25 : f32 to vector<1x1x1xf32>
      %c0_16 = arith.constant 0 : index
      %c0_17 = arith.constant 0 : index
      %c0_18 = arith.constant 0 : index
      %27 = vector.load %arg5[%c0_16, %c0_17, %c0_18] : memref<1x1x1xf32, #tpu.memory_space<vmem>>, vector<1x1x1xf32>
      tpu.vector_store %arg5[%c0_16, %c0_17, %c0_18], %26 {strides = array<i32>} : memref<1x1x1xf32, #tpu.memory_space<vmem>>, vector<1x1x1xf32>,
    } else {
    }
    return
  }
  func.func @transform_0(%arg0: i32, %arg1: i32) -> (i32, i32) {
    %c1_i32 = arith.constant 1 : i32
    %0 = arith.muli %arg0, %c1_i32 : i32
    %1 = arith.addi %0, %arg1 : i32
    %c0_i32 = arith.constant 0 : i32
    %c0_i32_0 = arith.constant 0 : i32
    return %1, %c0_i32 : i32, i32
  }
  func.func @transform_1(%arg0: i32, %arg1: i32) -> (i32, i32) {
    %c1_i32 = arith.constant 1 : i32
    %0 = arith.muli %arg0, %c1_i32 : i32
    %1 = arith.addi %0, %arg1 : i32
    %c0_i32 = arith.constant 0 : i32
    %c0_i32_0 = arith.constant 0 : i32
    return %1, %c0_i32 : i32, i32
  }
  func.func @transform_2(%arg0: i32, %arg1: i32) -> (i32, i32) {
    %c1_i32 = arith.constant 1 : i32
    %0 = arith.muli %arg0, %c1_i32 : i32
    %1 = arith.addi %0, %arg1 : i32
    %c0_i32 = arith.constant 0 : i32
    %c0_i32_0 = arith.constant 0 : i32
    return %1, %c0_i32 : i32, i32
  }
  func.func @transform_3(%arg0: i32, %arg1: i32) -> (i32, i32, i32) {
    %c0_i32 = arith.constant 0 : i32
    %c0_i32_0 = arith.constant 0 : i32
    %c0_i32_1 = arith.constant 0 : i32
    return %arg0, %c0_i32, %c0_i32_0 : i32, i32, i32
  }
}

</mosaic_0001>

<llo_original>
// kernel: squeeze.3
$region0: #{squeeze.3}
  %s0 = inlined_call_operand.vmem [shape: f32[2,16], index: 0, kind: input, shape index: {}]
  %s1 = inlined_call_operand.vmem [shape: f32[32], index: 1, kind: output, shape index: {}]
  $region1: #{squeeze.3} parent=0
    #allocation0 [shape = 'u8[4096]{0}', space=vmem, size = 0x1000, scoped, tag = 'scoped mem for output reshape']
    #allocation1 [shape = 'u8[4096]{0}', space=vmem, size = 0x1000, scoped, tag = 'scoped mem for input reshape']
    %s3 = ssub.s32 4, 1
    %v4 = vld [vmem:[%s0] sm:%s3]
    %5 = vst [vmem:[#allocation1] sm:%s3] %v4
    %v6 = vld [vmem:[#allocation1] sm:$0x1]
    %vm7 = vcmask 130048
    %8 = vst.msk [vmem:[#allocation0] sm:$0x1] %vm7, %v6
    %s9 = scalar_lea.vmem [#allocation1], 1
    %v10 = vld [vmem:[%s9] sm:$0x1]
    %11 = vrot.lane.b32.xlu0 %v10, 16
    %v12 = vpop.permute.xlu0 %11
    %vm13 = vcmask 261248
    %14 = vst.msk [vmem:[#allocation0] sm:$0x1] %vm13, %v12
    %s16 = ssub.s32 2, 1
    %v17 = vld [vmem:[#allocation0] sm:%s16]
    %s19 = ssub.s32 2, 1
    %20 = vst [vmem:[%s1] sm:%s19] %v17

// kernel: gauss_nll.1
$region0: #{gauss_nll.1}
  #allocation0 [shape = 'u32[]', space=smem, size = 0x4, offset = 0x4, fixed_abs, tag = 'smem constant byte address 0x4 - core index']
  #allocation1 [shape = 'u32[72,128]{1,0:T(1,128)}', space=vmem, size = 0x9000, scoped, tag = 'internal scratch']
  #allocation2 [shape = 'f32[16,128]{1,0:T(8,128)}', space=vmem, size = 0x2000, scoped, tag = 'scratch operand']
  %s0 = inlined_call_operand.vmem [shape: f32[16,128], index: 0, kind: input, shape index: {}]
  %s1 = inlined_call_operand.vmem [shape: f32[16,128], index: 1, kind: input, shape index: {}]
  %s2 = inlined_call_operand.vmem [shape: f32[16,128], index: 2, kind: input, shape index: {}]
  %s3 = inlined_call_operand.hbm [shape: f32[1,1,1], index: 3, kind: output, shape index: {}]
  %s4 = sld [smem:[#allocation0]]
  $region30: #{gauss_nll.1} parent=0
    _
  %s6 = ssub.s32 1, %s4
  %s7 = scalar_select 0, %s6, %s4
  $region1: #{gauss_nll.1} parent=0
    #allocation3 [shape = 'u8[512]{0}', space=vmem, size = 0x400, scoped, tag = 'output window, operand 0, single buffered']
    #allocation4 [shape = 's32[1]{0}', space=sflag, size = 0x4, scoped, tag = 'scoped memory for gauss_nll.1']
    %8 = vsyncpa [#allocation4], 0
    // Predicated region
    $region2: #{gauss_nll.1} parent=1 // pred_check
      _
    $region3: #{gauss_nll.1} parent=1 // pred_check_branch
      %10 = sbr.rel (0) target = $region5
    $region4: #{gauss_nll.1} parent=1 // pred_region
      %s11 = sadd.s32 0, 0
      %s12 = smul.u32 2, %s11
      %p13 = scmp.lt.s32.totalorder %s12, 1
      %s14 = scalar_select %p13, %s12, 1
      %s15 = smul.addr %s14, 8
      %s16 = scalar_lea.vmem %s0, %s15
      %s17 = sadd.s32 0, 0
      %s18 = smul.u32 2, %s17
    $region5: #{gauss_nll.1} parent=1 // pred_fallthru
      _
    // Predicated region
    $region6: #{gauss_nll.1} parent=1 // pred_check
      _
    $region7: #{gauss_nll.1} parent=1 // pred_check_branch
      %20 = sbr.rel (0) target = $region9
    $region8: #{gauss_nll.1} parent=1 // pred_region
      %s21 = sadd.s32 0, 0
      %s22 = smul.u32 2, %s21
      %p23 = scmp.lt.s32.totalorder %s22, 1
      %s24 = scalar_select %p23, %s22, 1
      %s25 = smul.addr %s24, 8
      %s26 = scalar_lea.vmem %s1, %s25
      %s27 = sadd.s32 0, 0
      %s28 = smul.u32 2, %s27
    $region9: #{gauss_nll.1} parent=1 // pred_fallthru
      _
    // Predicated region
    $region10: #{gauss_nll.1} parent=1 // pred_check
      _
    $region11: #{gauss_nll.1} parent=1 // pred_check_branch
      %30 = sbr.rel (0) target = $region13
    $region12: #{gauss_nll.1} parent=1 // pred_region
      %s31 = sadd.s32 0, 0
      %s32 = smul.u32 2, %s31
      %p33 = scmp.lt.s32.totalorder %s32, 1
      %s34 = scalar_select %p33, %s32, 1
      %s35 = smul.addr %s34, 8
      %s36 = scalar_lea.vmem %s2, %s35
      %s37 = sadd.s32 0, 0
      %s38 = smul.u32 2, %s37
    $region13: #{gauss_nll.1} parent=1 // pred_fallthru
      _
    %s39 = sadd.s32 0, 0
    %s40 = smul.u32 2, %s39
    %p41 = scmp.lt.s32.totalorder %s40, 1
    %s42 = scalar_select %p41, %s40, 1
    %s43 = smul.addr %s42, 8
    %s44 = scalar_lea.vmem %s0, %s43
    %s45 = sadd.s32 0, 0
    %s46 = smul.u32 2, %s45
    %p47 = scmp.lt.s32.totalorder %s46, 1
    %s48 = scalar_select %p47, %s46, 1
    %s49 = smul.addr %s48, 8
    %s50 = scalar_lea.vmem %s1, %s49
    %s51 = sadd.s32 0, 0
    %s52 = smul.u32 2, %s51
    %p53 = scmp.lt.s32.totalorder %s52, 1
    %s54 = scalar_select %p53, %s52, 1
    %s55 = smul.addr %s54, 8
    %s56 = scalar_lea.vmem %s2, %s55
    %s57 = sadd.s32 0, 0
    %s58 = smul.u32 2, %s57
    %p59 = scmp.lt.s32.totalorder %s58, 1
    %s60 = scalar_select %p59, %s58, 1
    %s61 = smul.addr %s60, 8
    %s62 = scalar_lea.vmem %s0, %s61
    %s63 = sadd.s32 0, 0
    %s64 = smul.u32 2, %s63
    %s65 = sadd.s32 0, 0
    %s66 = smul.u32 2, %s65
    %p67 = scmp.lt.s32.totalorder %s66, 1
    %s68 = scalar_select %p67, %s66, 1
    %s69 = smul.addr %s68, 8
    %s70 = scalar_lea.vmem %s1, %s69
    %s71 = sadd.s32 0, 0
    %s72 = smul.u32 2, %s71
    %s73 = sadd.s32 0, 0
    %s74 = smul.u32 2, %s73
    %p75 = scmp.lt.s32.totalorder %s74, 1
    %s76 = scalar_select %p75, %s74, 1
    %s77 = smul.addr %s76, 8
    %s78 = scalar_lea.vmem %s2, %s77
    %s79 = sadd.s32 0, 0
    %s80 = smul.u32 2, %s79
    %p81 = scmp.eq.s32.totalorder 0, 0
    // Predicated region
    $region14: #{gauss_nll.1} parent=1 // pred_check
      %p82 = pneg %p81
    $region15: #{gauss_nll.1} parent=1 // pred_check_branch
      %84 = sbr.rel (%p82) target = $region17
    $region16: #{gauss_nll.1} parent=1 // pred_region
      %85 = vst [vmem:[#allocation2] sm:$0xff] 0.0
      %86 = vst [vmem:[#allocation2 + $0x8] sm:$0xff] 0.0
    $region17: #{gauss_nll.1} parent=1 // pred_fallthru
      _
    %v87 = vld [vmem:[%s62] sm:$0xff]
    %v88 = vld [vmem:[%s62 + $0x8] sm:$0xff]
    %v89 = vld [vmem:[%s70] sm:$0xff]
    %v90 = vld [vmem:[%s70 + $0x8] sm:$0xff]
    %v91 = vld [vmem:[%s78] sm:$0xff]
    %v92 = vld [vmem:[%s78 + $0x8] sm:$0xff]
    %v93 = vsub.f32 %v91, %v87
    %v94 = vsub.f32 %v92, %v88
    %v95 = vld [vmem:[#allocation2] sm:$0xff]
    %v96 = vld [vmem:[#allocation2 + $0x8] sm:$0xff]
    %v97 = vmul.f32 %v93, %v93
    %v98 = vmul.f32 %v94, %v94
    %v99 = vadd.f32 %v97, 6.1035156e-05
    %v100 = vadd.f32 %v98, 6.1035156e-05
    %v101 = vsub.f32 0.0, %v89
    %v102 = vsub.f32 0.0, %v90
    %v103 = vmul.f32 %v101, 1.442695
    %v104 = vpow.pop %v103
    %v105 = vmul.f32 %v102, 1.442695
    %v106 = vpow.pop %v105
    %v107 = vmul.f32 %v99, %v104
    %v108 = vmul.f32 %v100, %v106
    %v109 = vadd.f32 %v89, %v107
    %v110 = vadd.f32 %v90, %v108
    %v111 = vadd.f32 %v95, %v109
    %v112 = vadd.f32 %v96, %v110
    %113 = vst [vmem:[#allocation2] sm:$0xff] %v111
    %114 = vst [vmem:[#allocation2 + $0x8] sm:$0xff] %v112
    // Predicated region
    $region18: #{gauss_nll.1} parent=1 // pred_check
      %p115 = pneg %p81
    $region19: #{gauss_nll.1} parent=1 // pred_check_branch
      %117 = sbr.rel (%p115) target = $region21
    $region20: #{gauss_nll.1} parent=1 // pred_region
      %v118 = vld [vmem:[#allocation2] sm:$0xff]
      %v119 = vld [vmem:[#allocation2 + $0x8] sm:$0xff]
      %v120 = vadd.f32 %v118, %v119
      %121 = vadd.xlane.f32.xlu0 %v120
      %v122 = vpop.xlane.xlu0 %121
      %v123 = vrot.slane %v122, 4
      %v124 = vadd.f32 %v122, %v123
      %v125 = vrot.slane %v124, 2
      %v126 = vadd.f32 %v124, %v125
      %v127 = vrot.slane %v126, 1
      %v128 = vadd.f32 %v126, %v127
      %s129 = vtos %v128
      %v130 = vstv %s129
      %vm131 = vcmask 0
      %132 = vst.msk [vmem:[#allocation3] sm:$0x1] %vm131, %v130
    $region21: #{gauss_nll.1} parent=1 // pred_fallthru
      _
    // Predicated region
    $region22: #{gauss_nll.1} parent=1 // pred_check
      _
    $region23: #{gauss_nll.1} parent=1 // pred_check_branch
      %134 = sbr.rel (0) target = $region25
    $region24: #{gauss_nll.1} parent=1 // pred_region
      %136 = vsyncadd [#allocation4], 0
      %s138 = sshll.u32 [#allocation3], 4
      %s139 = int_to_ptr.vmem [resolvable:$true] %s138
      %s140 = sshll.u32 %s3, 4
      %s141 = int_to_ptr.hbm [resolvable:$true] %s140
      %143 = dma.vmem_to_hbm [thread:$0]  %s139, 16, %s141, [#allocation4]
    $region25: #{gauss_nll.1} parent=1 // pred_fallthru
      _
    // Predicated region
    $region26: #{gauss_nll.1} parent=1 // pred_check
      _
    $region27: #{gauss_nll.1} parent=1 // pred_check_branch
      %145 = sbr.rel (0) target = $region29
    $region28: #{gauss_nll.1} parent=1 // pred_region
      %147 = dma.done [#allocation4], 16
    $region29: #{gauss_nll.1} parent=1 // pred_fallthru
      _
    %148 = vsyncpa [#allocation4], 1

</llo_original>
